<compile_context>
chip_gen: v7x
topology: tpu7x:2x2x1
jax: 0.10.0
libtpu: 0.0.40
codegen_flags: <defaults>
</compile_context>

<pallas_src>
import jax
import jax.numpy as jnp
from jax.experimental import pallas as pl
from jax.experimental.pallas import tpu as pltpu

_H1, _H2, _H3 = 256, 128, 64
_PAIR = 2                      # batch rows packed per lane-dense output row (2 * 64 = 128 lanes)


def _round_up(n, m):
    return ((n + m - 1) // m) * m


def _num_tensorcores():
    """Best-effort TensorCores-per-chip (2 on v7x, 1 on v5e/v6e).  Only used to
    decide whether forcing >= 2 grid steps buys ("parallel",) core sharding."""
    try:
        info = pltpu.get_tpu_info()
        for attr in ("num_cores", "core_count", "num_tensorcores", "tensorcore_count"):
            n = getattr(info, attr, None)
            if isinstance(n, int) and n > 0:
                return n
    except Exception:
        pass
    try:
        n = getattr(jax.devices()[0], "num_cores", None)
        if isinstance(n, int) and n > 0:
            return n
    except Exception:
        pass
    return 1


def _block_diag2(w):
    """[[w, 0], [0, w]] — lets one MXU pass process two batch rows packed along lanes."""
    z = jnp.zeros_like(w)
    return jnp.concatenate(
        [jnp.concatenate([w, z], axis=1), jnp.concatenate([z, w], axis=1)], axis=0)


def _mlp_kernel(x_ref, w1_ref, b1_ref, w2_ref, b2_ref, w3_ref, b3_ref, o_ref):
    """Fused 3-layer MLP on a pair-packed batch tile.

    x_ref : (btp, 2*D_in) f32  — two batch rows per sublane row (DMA'd as f32)
    w*_ref: block-diagonal packed weights (bf16 by default), fully resident
    b*_ref: duplicated biases, f32 (epilogue stays f32; v5e VPU has no bf16)
    o_ref : (btp, 128)         — lane-dense output block, unmasked full-width stores
    """
    cdt = w1_ref.dtype
    x = x_ref[...].astype(cdt)                 # in-kernel cast on the VPU (free slot here)
    h = jnp.dot(x, w1_ref[...], preferred_element_type=jnp.float32)
    h = jnp.maximum(h + b1_ref[...], 0.0)
    h = jnp.dot(h.astype(cdt), w2_ref[...], preferred_element_type=jnp.float32)
    h = jnp.maximum(h + b2_ref[...], 0.0)
    h = jnp.dot(h.astype(cdt), w3_ref[...], preferred_element_type=jnp.float32)
    h = jnp.maximum(h + b3_ref[...], 0.0)
    o_ref[...] = h.astype(o_ref.dtype)


def feature_ex_1d(x, params, *, batch_tile=512, use_bf16=True, out_dtype=None):
    """x: (B, input_size) float32. params: w{1,2,3} of shape (in,out), b{1,2,3} of shape (1,out).

    out_dtype: defaults to x.dtype (f32, PyTorch parity).  Pass jnp.bfloat16 to
    halve output writeback if the downstream consumer tolerates it.
    """
    B, D_in = x.shape
    out_dtype = x.dtype if out_dtype is None else jnp.dtype(out_dtype)
    out_isz = jnp.dtype(out_dtype).itemsize
    cdt = jnp.bfloat16 if use_bf16 else x.dtype

    # --- pack weights block-diagonally (lane-dense output straight off the MXU) ---
    # NOTE: with non-finite inputs (inf/NaN), the 0-block products become NaN and
    # can leak between the two rows of a pair; for finite inputs the math is exact
    # (adding exact zeros never changes f32 accumulation).
    w1 = _block_diag2(params["w1"]).astype(cdt)          # (2*D_in, 512)
    w2 = _block_diag2(params["w2"]).astype(cdt)          # (512, 256)
    w3 = _block_diag2(params["w3"]).astype(cdt)          # (256, 128)
    b1 = jnp.tile(params["b1"].reshape(1, -1), (1, _PAIR)).astype(jnp.float32)
    b2 = jnp.tile(params["b2"].reshape(1, -1), (1, _PAIR)).astype(jnp.float32)
    b3 = jnp.tile(params["b3"].reshape(1, -1), (1, _PAIR)).astype(jnp.float32)

    # --- pair the batch: (B, D_in) -> (B/2, 2*D_in); row-major so the reshape is free ---
    B_even = _round_up(B, _PAIR)
    if B_even != B:                                      # only an odd batch pads one zero row
        x = jnp.pad(x, ((0, B_even - B), (0, 0)))
    Bp = B_even // _PAIR
    xp = x.reshape(Bp, _PAIR * D_in)

    # --- batch tile (in pair-rows): big for overhead amortization; cap so the grid
    #     has >= num_tensorcores steps only when that buys core sharding (v7x). ---
    row_granule = 8 if out_isz >= 4 else 16              # sublane granule for the output tile
    cores = _num_tensorcores()
    btp_req = max(row_granule, _round_up(max(batch_tile, _PAIR) // _PAIR, row_granule))
    btp_cap = max(row_granule, _round_up(pl.cdiv(Bp, cores), row_granule))
    btp = min(btp_req, btp_cap)
    grid = (pl.cdiv(Bp, btp),)                           # ragged last block is boundary-masked

    D_out = _PAIR * _H3                                  # 128 lanes
    nbytes = lambda a: a.size * a.dtype.itemsize
    w_bytes = sum(nbytes(a) for a in (w1, b1, w2, b2, w3, b3))

    cost = pl.CostEstimate(
        flops=2 * Bp * (w1.shape[0] * w1.shape[1]
                        + w2.shape[0] * w2.shape[1]
                        + w3.shape[0] * w3.shape[1]),
        transcendentals=0,
        bytes_accessed=nbytes(xp) + Bp * D_out * out_isz + w_bytes,
    )

    # Right-sized scoped-VMEM: only override the default when we actually need more.
    vmem_need = (2 * btp * xp.shape[1] * xp.dtype.itemsize   # x tile, double-buffered
                 + 2 * btp * D_out * out_isz                 # out tile, double-buffered
                 + 2 * w_bytes                               # resident weights (2 bufs)
                 + btp * _PAIR * (_H1 + _H2) * 4             # f32 intermediates
                 + (2 << 20))                                # headroom
    vmem_limit = None if vmem_need <= (16 << 20) else int(vmem_need)

    # Weights/biases fully resident (block == full array), reused every grid step.
    # (Single-buffering them would halve their VMEM; irrelevant at ~400 KiB.)
    full = lambda a: pl.BlockSpec(a.shape, lambda i: (0,) * a.ndim)

    out_flat = pl.pallas_call(
        _mlp_kernel,
        out_shape=jax.ShapeDtypeStruct((Bp, D_out), out_dtype),
        grid_spec=pltpu.PrefetchScalarGridSpec(
            num_scalar_prefetch=0,
            grid=grid,
            in_specs=[
                pl.BlockSpec((btp, xp.shape[1]), lambda i: (i, 0)),
                full(w1), full(b1), full(w2), full(b2), full(w3), full(b3),
            ],
            out_specs=pl.BlockSpec((btp, D_out), lambda i: (i, 0)),
        ),
        compiler_params=pltpu.CompilerParams(
            dimension_semantics=("parallel",),
            vmem_limit_bytes=vmem_limit,
        ),
        cost_estimate=cost,
    )(xp, w1, b1, w2, b2, w3, b3)

    # Free layout change back to (B, 64); slice only in the (rare) odd-batch case.
    out = out_flat.reshape(B_even, _H3)
    return out if B_even == B else out[:B]


def init_params(key, input_size):
    """Deterministic synthetic init (PyTorch nn.Linear-style uniform bounds)."""
    sizes = [(input_size, _H1), (_H1, _H2), (_H2, _H3)]
    params = {}
    for idx, (fan_in, fan_out) in enumerate(sizes, start=1):
        key, kw, kb = jax.random.split(key, 3)
        bound = 1.0 / (fan_in ** 0.5)
        params[f"w{idx}"] = jax.random.uniform(
            kw, (fan_in, fan_out), jnp.float32, -bound, bound)
        params[f"b{idx}"] = jax.random.uniform(
            kb, (1, fan_out), jnp.float32, -bound, bound)
    return params


def feature_ex_1d_ref(x, params, dot_dtype=None):
    """Pure-JAX reference. dot_dtype=None -> f32 (PyTorch semantics);
    dot_dtype=bf16 -> same operand quantization as the kernel's fast path."""
    h = x
    for i in (1, 2, 3):
        w, b = params[f"w{i}"], params[f"b{i}"].reshape(1, -1)
        if dot_dtype is not None:
            h = jnp.dot(h.astype(dot_dtype), w.astype(dot_dtype),
                        preferred_element_type=jnp.float32)
        else:
            h = jnp.dot(h, w, preferred_element_type=jnp.float32)
        h = jnp.maximum(h + b, 0.0)
    return h


if __name__ == "__main__":
    key = jax.random.PRNGKey(0)
    k_x, k_p = jax.random.split(key)

    batch = 200          # not a multiple of the tile -> exercises the boundary-masked ragged block
    input_size = 32
    x = jax.random.normal(k_x, (batch, input_size), jnp.float32)
    params = init_params(k_p, input_size)

    # Small tile so the demo exercises a multi-step grid (200 rows -> 4 blocks of 64).
    out = jax.block_until_ready(feature_ex_1d(x, params, batch_tile=64))
    assert out.shape == (batch, _H3), out.shape
    assert out.dtype == x.dtype, out.dtype

    # Tight check vs a reference using the same bf16 matmul operand quantization.
    ref_bf16 = feature_ex_1d_ref(x, params, dot_dtype=jnp.bfloat16)
    assert jnp.allclose(out, ref_bf16, atol=1e-2, rtol=1e-2), "mismatch vs bf16-matched reference"

    # Loose check vs the exact f32 PyTorch-equivalent reference (bf16 operand rounding only).
    ref_f32 = feature_ex_1d_ref(x, params)
    assert jnp.allclose(out, ref_f32, atol=7e-2, rtol=7e-2), "mismatch vs f32 reference"

    print("KERNEL_OK")
</pallas_src>

<mosaic_0001>
module attributes {stable_mosaic.version = 11 : i64} {
  func.func @_mlp_kernel(%arg0: i32, %arg1: memref<32x64xf32, #tpu.memory_space<vmem>>, %arg2: memref<64x512xbf16, #tpu.memory_space<vmem>>, %arg3: memref<1x512xf32, #tpu.memory_space<vmem>>, %arg4: memref<512x256xbf16, #tpu.memory_space<vmem>>, %arg5: memref<1x256xf32, #tpu.memory_space<vmem>>, %arg6: memref<256x128xbf16, #tpu.memory_space<vmem>>, %arg7: memref<1x128xf32, #tpu.memory_space<vmem>>, %arg8: memref<32x128xf32, #tpu.memory_space<vmem>>) attributes {dimension_semantics = [#tpu.dimension_semantics<parallel>], iteration_bounds = array<i64: 4>, scalar_prefetch = 0 : i64, scratch_operands = 0 : i64, tpu.core_type = #tpu.core_type<tc>, window_params = [{transform_indices = @transform_0, window_bounds = array<i64: 32, 64>}, {pipeline_mode = #tpu.pipeline_mode<synchronous>, transform_indices = @transform_1, window_bounds = array<i64: 64, 512>}, {pipeline_mode = #tpu.pipeline_mode<synchronous>, transform_indices = @transform_2, window_bounds = array<i64: 1, 512>}, {pipeline_mode = #tpu.pipeline_mode<synchronous>, transform_indices = @transform_3, window_bounds = array<i64: 512, 256>}, {pipeline_mode = #tpu.pipeline_mode<synchronous>, transform_indices = @transform_4, window_bounds = array<i64: 1, 256>}, {pipeline_mode = #tpu.pipeline_mode<synchronous>, transform_indices = @transform_5, window_bounds = array<i64: 256, 128>}, {pipeline_mode = #tpu.pipeline_mode<synchronous>, transform_indices = @transform_6, window_bounds = array<i64: 1, 128>}, {transform_indices = @transform_7, window_bounds = array<i64: 32, 128>}]} {
    %c0 = arith.constant 0 : index
    %c0_0 = arith.constant 0 : index
    %0 = vector.load %arg1[%c0, %c0_0] : memref<32x64xf32, #tpu.memory_space<vmem>>, vector<32x64xf32>
    %1 = arith.truncf %0 : vector<32x64xf32> to vector<32x64xbf16>
    %c0_1 = arith.constant 0 : index
    %c0_2 = arith.constant 0 : index
    %2 = vector.load %arg2[%c0_1, %c0_2] : memref<64x512xbf16, #tpu.memory_space<vmem>>, vector<64x512xbf16>
    %cst = arith.constant dense<0.000000e+00> : vector<32x512xf32>
    %3 = tpu.matmul %1, %2, %cst {dimension_numbers = #tpu.dot_dimension_numbers<[1], [0], [0], [1], [0, 0, 1, 1], [], []>} : vector<32x64xbf16>, vector<64x512xbf16>, vector<32x512xf32> -> vector<32x512xf32>
    %c0_3 = arith.constant 0 : index
    %c0_4 = arith.constant 0 : index
    %4 = vector.load %arg3[%c0_3, %c0_4] : memref<1x512xf32, #tpu.memory_space<vmem>>, vector<1x512xf32>
    %5 = vector.broadcast %4 : vector<1x512xf32> to vector<32x512xf32>
    %6 = arith.addf %3, %5 : vector<32x512xf32>
    %cst_5 = arith.constant 0.000000e+00 : f32
    %7 = vector.broadcast %cst_5 : f32 to vector<32x512xf32>
    %8 = arith.maximumf %6, %7 : vector<32x512xf32>
    %9 = arith.truncf %8 : vector<32x512xf32> to vector<32x512xbf16>
    %c0_6 = arith.constant 0 : index
    %c0_7 = arith.constant 0 : index
    %10 = vector.load %arg4[%c0_6, %c0_7] : memref<512x256xbf16, #tpu.memory_space<vmem>>, vector<512x256xbf16>
    %cst_8 = arith.constant dense<0.000000e+00> : vector<32x256xf32>
    %11 = tpu.matmul %9, %10, %cst_8 {dimension_numbers = #tpu.dot_dimension_numbers<[1], [0], [0], [1], [0, 0, 1, 1], [], []>} : vector<32x512xbf16>, vector<512x256xbf16>, vector<32x256xf32> -> vector<32x256xf32>
    %c0_9 = arith.constant 0 : index
    %c0_10 = arith.constant 0 : index
    %12 = vector.load %arg5[%c0_9, %c0_10] : memref<1x256xf32, #tpu.memory_space<vmem>>, vector<1x256xf32>
    %13 = vector.broadcast %12 : vector<1x256xf32> to vector<32x256xf32>
    %14 = arith.addf %11, %13 : vector<32x256xf32>
    %cst_11 = arith.constant 0.000000e+00 : f32
    %15 = vector.broadcast %cst_11 : f32 to vector<32x256xf32>
    %16 = arith.maximumf %14, %15 : vector<32x256xf32>
    %17 = arith.truncf %16 : vector<32x256xf32> to vector<32x256xbf16>
    %c0_12 = arith.constant 0 : index
    %c0_13 = arith.constant 0 : index
    %18 = vector.load %arg6[%c0_12, %c0_13] : memref<256x128xbf16, #tpu.memory_space<vmem>>, vector<256x128xbf16>
    %cst_14 = arith.constant dense<0.000000e+00> : vector<32x128xf32>
    %19 = tpu.matmul %17, %18, %cst_14 {dimension_numbers = #tpu.dot_dimension_numbers<[1], [0], [0], [1], [0, 0, 1, 1], [], []>} : vector<32x256xbf16>, vector<256x128xbf16>, vector<32x128xf32> -> vector<32x128xf32>
    %c0_15 = arith.constant 0 : index
    %c0_16 = arith.constant 0 : index
    %20 = vector.load %arg7[%c0_15, %c0_16] : memref<1x128xf32, #tpu.memory_space<vmem>>, vector<1x128xf32>
    %21 = vector.broadcast %20 : vector<1x128xf32> to vector<32x128xf32>
    %22 = arith.addf %19, %21 : vector<32x128xf32>
    %cst_17 = arith.constant 0.000000e+00 : f32
    %23 = vector.broadcast %cst_17 : f32 to vector<32x128xf32>
    %24 = arith.maximumf %22, %23 : vector<32x128xf32>
    %c0_18 = arith.constant 0 : index
    %c0_19 = arith.constant 0 : index
    %25 = vector.load %arg8[%c0_18, %c0_19] : memref<32x128xf32, #tpu.memory_space<vmem>>, vector<32x128xf32>
    tpu.vector_store %arg8[%c0_18, %c0_19], %24 {strides = array<i32>} : memref<32x128xf32, #tpu.memory_space<vmem>>, vector<32x128xf32>,
    return
  }
  func.func @transform_0(%arg0: i32) -> (i32, i32) {
    %c0_i32 = arith.constant 0 : i32
    %c0_i32_0 = arith.constant 0 : i32
    return %arg0, %c0_i32 : i32, i32
  }
  func.func @transform_1(%arg0: i32) -> (i32, i32) {
    %c0_i32 = arith.constant 0 : i32
    %c0_i32_0 = arith.constant 0 : i32
    %c0_i32_1 = arith.constant 0 : i32
    return %c0_i32, %c0_i32_0 : i32, i32
  }
  func.func @transform_2(%arg0: i32) -> (i32, i32) {
    %c0_i32 = arith.constant 0 : i32
    %c0_i32_0 = arith.constant 0 : i32
    %c0_i32_1 = arith.constant 0 : i32
    return %c0_i32, %c0_i32_0 : i32, i32
  }
  func.func @transform_3(%arg0: i32) -> (i32, i32) {
    %c0_i32 = arith.constant 0 : i32
    %c0_i32_0 = arith.constant 0 : i32
    %c0_i32_1 = arith.constant 0 : i32
    return %c0_i32, %c0_i32_0 : i32, i32
  }
  func.func @transform_4(%arg0: i32) -> (i32, i32) {
    %c0_i32 = arith.constant 0 : i32
    %c0_i32_0 = arith.constant 0 : i32
    %c0_i32_1 = arith.constant 0 : i32
    return %c0_i32, %c0_i32_0 : i32, i32
  }
  func.func @transform_5(%arg0: i32) -> (i32, i32) {
    %c0_i32 = arith.constant 0 : i32
    %c0_i32_0 = arith.constant 0 : i32
    %c0_i32_1 = arith.constant 0 : i32
    return %c0_i32, %c0_i32_0 : i32, i32
  }
  func.func @transform_6(%arg0: i32) -> (i32, i32) {
    %c0_i32 = arith.constant 0 : i32
    %c0_i32_0 = arith.constant 0 : i32
    %c0_i32_1 = arith.constant 0 : i32
    return %c0_i32, %c0_i32_0 : i32, i32
  }
  func.func @transform_7(%arg0: i32) -> (i32, i32) {
    %c0_i32 = arith.constant 0 : i32
    %c0_i32_0 = arith.constant 0 : i32
    return %arg0, %c0_i32 : i32, i32
  }
}

</mosaic_0001>

<llo_original>
// kernel: tpu_custom_call.1
$region0: #{tpu_custom_call.1}
  #allocation0 [shape = 'u32[]', space=smem, size = 0x4, offset = 0x4, fixed_abs, tag = 'smem constant byte address 0x4 - core index']
  #allocation1 [shape = 'u32[144,128]{1,0:T(1,128)}', space=vmem, size = 0x12000, scoped, tag = 'internal scratch']
  %s0 = inlined_call_operand.vmem [shape: f32[100,64], index: 0, kind: input, shape index: {}]
  %s1 = inlined_call_operand.vmem [shape: bf16[64,512], index: 1, kind: input, shape index: {}]
  %s2 = inlined_call_operand.vmem [shape: f32[1,512], index: 2, kind: input, shape index: {}]
  %s3 = inlined_call_operand.hbm [shape: bf16[512,256], index: 3, kind: input, shape index: {}]
  %s4 = inlined_call_operand.vmem [shape: f32[1,256], index: 4, kind: input, shape index: {}]
  %s5 = inlined_call_operand.hbm [shape: bf16[256,128], index: 5, kind: input, shape index: {}]
  %s6 = inlined_call_operand.vmem [shape: f32[1,128], index: 6, kind: input, shape index: {}]
  %s7 = inlined_call_operand.hbm [shape: f32[100,128], index: 7, kind: output, shape index: {}]
  %s8 = sld [smem:[#allocation0]]
  $region69: #{tpu_custom_call.1} parent=0
    _
  %s10 = ssub.s32 1, %s8
  %s11 = scalar_select 0, %s10, %s8
  $region1: #{tpu_custom_call.1} parent=0
    #allocation2 [shape = 'u8[262144]{0}', space=vmem, size = 0x40000, scoped, tag = 'input window, operand 3, single buffered']
    #allocation3 [shape = 's32[2]{0}', space=sflag, size = 0x8, scoped, tag = 'scoped memory for tpu_custom_call.1']
    #allocation4 [shape = 's32[2]{0}', space=sflag, size = 0x8, scoped, tag = 'scoped memory for tpu_custom_call.1']
    #allocation5 [shape = 'u8[65536]{0}', space=vmem, size = 0x10000, scoped, tag = 'input window, operand 5, single buffered']
    #allocation6 [shape = 's32[1]{0}', space=sflag, size = 0x4, scoped, tag = 'scoped memory for tpu_custom_call.1']
    #allocation7 [shape = 'u8[32768]{0}', space=vmem, size = 0x8000, scoped, tag = 'output window, operand 0']
    %12 = vsyncpa [#allocation3], 0
    %13 = vsyncpa [#allocation6], 0
    %14 = vsyncpa [#allocation4], 0
    %s15 = scalar_lea.sflag [#allocation4], 1
    %16 = vsyncpa %s15, 0
    loop: start=0, step=1, limit=6
    $region2: #{tpu_custom_call.1} parent=1 // loop_pre_header
      _
    $region3: #{tpu_custom_call.1} parent=1 // loop_header
      %s18 = sphi 0, %s22
      %p19 = scmp.ge.s32.totalorder %s18, 6
      %s28 = sphi 0, %s30
      %s31 = sphi 0, %s28
      %s32 = sphi 0, %s31
      %s48 = sphi 0, %s32
      %s52 = sphi 0, %s52
      %s54 = sphi 0, %s52
      %s55 = sphi 0, %s54
      %s69 = sphi 0, %s55
      %s73 = sphi 0, %s73
      %s75 = sphi 0, %s73
      %s76 = sphi 0, %s75
      %s90 = sphi 0, %s76
      %s94 = sphi 0, %s94
      %s96 = sphi 0, %s94
      %s97 = sphi 0, %s96
      %s111 = sphi 0, %s97
      %s115 = sphi 0, %s115
      %s117 = sphi 0, %s115
      %s118 = sphi 0, %s117
      %s132 = sphi 0, %s118
      %s136 = sphi 0, %s136
      %s138 = sphi 0, %s136
      %s139 = sphi 0, %s138
      %s153 = sphi 0, %s139
      %s157 = sphi 0, %s157
      %s159 = sphi 0, %s157
      %s160 = sphi 0, %s159
      %s174 = sphi 0, %s160
      %s180 = sphi 0, %s182
      %s183 = sphi 0, %s180
      %s184 = sphi 0, %s183
      %s200 = sphi 0, %s184
    $region4: #{tpu_custom_call.1} parent=1 // loop_header_branch
      %21 = sbr.rel (%p19) target = $region8
    $region5: #{tpu_custom_call.1} parent=1 // loop_body
      %s23 = ssub.s32 %s18, 1
      %s24 = ssub.s32 %s18, 2
      %s25 = sadd.s32 %s18, 1
      %s26 = ssub.s32 %s18, %s25
      %p27 = scmp.eq.s32.totalorder %s26, 0
      %s29 = sadd.s32 %s28, 1
      %s30 = scalar_select %p27, %s28, %s29
      %p33 = pneg %p27
      %p34 = scmp.eq.s32.totalorder %s18, 3
      %p35 = por %p33, %p34
      %p36 = scmp.ne.s32.totalorder %s28, %s31
      %p37 = scmp.eq.s32.totalorder %s18, 0
      %p38 = por %p36, %p37
      %p39 = scmp.ne.s32.totalorder %s28, %s31
      %p40 = scmp.eq.s32.totalorder %s23, 3
      %p41 = por %p39, %p40
      %p42 = scmp.ne.s32.totalorder %s31, %s32
      %p43 = scmp.eq.s32.totalorder %s23, 0
      %p44 = por %p42, %p43
      %p45 = scmp.ne.s32.totalorder %s31, %s32
      %p46 = scmp.eq.s32.totalorder %s24, 3
      %p47 = por %p45, %p46
      %p49 = scmp.ne.s32.totalorder %s32, %s48
      %p50 = scmp.eq.s32.totalorder %s24, 0
      %p51 = por %p49, %p50
      %s53 = sadd.s32 %s52, 1
      %p56 = scmp.eq.s32.totalorder %s18, 3
      %p57 = scmp.ne.s32.totalorder %s52, %s54
      %p58 = scmp.eq.s32.totalorder %s18, 0
      %p59 = por %p57, %p58
      %p60 = scmp.ne.s32.totalorder %s52, %s54
      %p61 = scmp.eq.s32.totalorder %s23, 3
      %p62 = por %p60, %p61
      %p63 = scmp.ne.s32.totalorder %s54, %s55
      %p64 = scmp.eq.s32.totalorder %s23, 0
      %p65 = por %p63, %p64
      %p66 = scmp.ne.s32.totalorder %s54, %s55
      %p67 = scmp.eq.s32.totalorder %s24, 3
      %p68 = por %p66, %p67
      %p70 = scmp.ne.s32.totalorder %s55, %s69
      %p71 = scmp.eq.s32.totalorder %s24, 0
      %p72 = por %p70, %p71
      %s74 = sadd.s32 %s73, 1
      %p77 = scmp.eq.s32.totalorder %s18, 3
      %p78 = scmp.ne.s32.totalorder %s73, %s75
      %p79 = scmp.eq.s32.totalorder %s18, 0
      %p80 = por %p78, %p79
      %p81 = scmp.ne.s32.totalorder %s73, %s75
      %p82 = scmp.eq.s32.totalorder %s23, 3
      %p83 = por %p81, %p82
      %p84 = scmp.ne.s32.totalorder %s75, %s76
      %p85 = scmp.eq.s32.totalorder %s23, 0
      %p86 = por %p84, %p85
      %p87 = scmp.ne.s32.totalorder %s75, %s76
      %p88 = scmp.eq.s32.totalorder %s24, 3
      %p89 = por %p87, %p88
      %p91 = scmp.ne.s32.totalorder %s76, %s90
      %p92 = scmp.eq.s32.totalorder %s24, 0
      %p93 = por %p91, %p92
      %s95 = sadd.s32 %s94, 1
      %p98 = scmp.eq.s32.totalorder %s18, 3
      %p99 = scmp.ne.s32.totalorder %s94, %s96
      %p100 = scmp.eq.s32.totalorder %s18, 0
      %p101 = por %p99, %p100
      %p102 = scmp.ne.s32.totalorder %s94, %s96
      %p103 = scmp.eq.s32.totalorder %s23, 3
      %p104 = por %p102, %p103
      %p105 = scmp.ne.s32.totalorder %s96, %s97
      %p106 = scmp.eq.s32.totalorder %s23, 0
      %p107 = por %p105, %p106
      %p108 = scmp.ne.s32.totalorder %s96, %s97
      %p109 = scmp.eq.s32.totalorder %s24, 3
      %p110 = por %p108, %p109
      %p112 = scmp.ne.s32.totalorder %s97, %s111
      %p113 = scmp.eq.s32.totalorder %s24, 0
      %p114 = por %p112, %p113
      %s116 = sadd.s32 %s115, 1
      %p119 = scmp.eq.s32.totalorder %s18, 3
      %p120 = scmp.ne.s32.totalorder %s115, %s117
      %p121 = scmp.eq.s32.totalorder %s18, 0
      %p122 = por %p120, %p121
      %p123 = scmp.ne.s32.totalorder %s115, %s117
      %p124 = scmp.eq.s32.totalorder %s23, 3
      %p125 = por %p123, %p124
      %p126 = scmp.ne.s32.totalorder %s117, %s118
      %p127 = scmp.eq.s32.totalorder %s23, 0
      %p128 = por %p126, %p127
      %p129 = scmp.ne.s32.totalorder %s117, %s118
      %p130 = scmp.eq.s32.totalorder %s24, 3
      %p131 = por %p129, %p130
      %p133 = scmp.ne.s32.totalorder %s118, %s132
      %p134 = scmp.eq.s32.totalorder %s24, 0
      %p135 = por %p133, %p134
      %s137 = sadd.s32 %s136, 1
      %p140 = scmp.eq.s32.totalorder %s18, 3
      %p141 = scmp.ne.s32.totalorder %s136, %s138
      %p142 = scmp.eq.s32.totalorder %s18, 0
      %p143 = por %p141, %p142
      %p144 = scmp.ne.s32.totalorder %s136, %s138
      %p145 = scmp.eq.s32.totalorder %s23, 3
      %p146 = por %p144, %p145
      %p147 = scmp.ne.s32.totalorder %s138, %s139
      %p148 = scmp.eq.s32.totalorder %s23, 0
      %p149 = por %p147, %p148
      %p150 = scmp.ne.s32.totalorder %s138, %s139
      %p151 = scmp.eq.s32.totalorder %s24, 3
      %p152 = por %p150, %p151
      %p154 = scmp.ne.s32.totalorder %s139, %s153
      %p155 = scmp.eq.s32.totalorder %s24, 0
      %p156 = por %p154, %p155
      %s158 = sadd.s32 %s157, 1
      %p161 = scmp.eq.s32.totalorder %s18, 3
      %p162 = scmp.ne.s32.totalorder %s157, %s159
      %p163 = scmp.eq.s32.totalorder %s18, 0
      %p164 = por %p162, %p163
      %p165 = scmp.ne.s32.totalorder %s157, %s159
      %p166 = scmp.eq.s32.totalorder %s23, 3
      %p167 = por %p165, %p166
      %p168 = scmp.ne.s32.totalorder %s159, %s160
      %p169 = scmp.eq.s32.totalorder %s23, 0
      %p170 = por %p168, %p169
      %p171 = scmp.ne.s32.totalorder %s159, %s160
      %p172 = scmp.eq.s32.totalorder %s24, 3
      %p173 = por %p171, %p172
      %p175 = scmp.ne.s32.totalorder %s160, %s174
      %p176 = scmp.eq.s32.totalorder %s24, 0
      %p177 = por %p175, %p176
      %s178 = ssub.s32 %s18, %s25
      %p179 = scmp.eq.s32.totalorder %s178, 0
      %s181 = sadd.s32 %s180, 1
      %s182 = scalar_select %p179, %s180, %s181
      %p185 = pneg %p179
      %p186 = scmp.eq.s32.totalorder %s18, 3
      %p187 = por %p185, %p186
      %p188 = scmp.ne.s32.totalorder %s180, %s183
      %p189 = scmp.eq.s32.totalorder %s18, 0
      %p190 = por %p188, %p189
      %p191 = scmp.ne.s32.totalorder %s180, %s183
      %p192 = scmp.eq.s32.totalorder %s23, 3
      %p193 = por %p191, %p192
      %p194 = scmp.ne.s32.totalorder %s183, %s184
      %p195 = scmp.eq.s32.totalorder %s23, 0
      %p196 = por %p194, %p195
      %p197 = scmp.ne.s32.totalorder %s183, %s184
      %p198 = scmp.eq.s32.totalorder %s24, 3
      %p199 = por %p197, %p198
      %p201 = scmp.ne.s32.totalorder %s184, %s200
      %p202 = scmp.eq.s32.totalorder %s24, 0
      %p203 = por %p201, %p202
      %p204 = scmp.le.s32.totalorder 1, %s18
      %p205 = scmp.lt.s32.totalorder %s18, 5
      %p206 = pnand %p204, %p205
      %p207 = pneg %p206
      // Predicated region
      $region9: #{tpu_custom_call.1} parent=5 // pred_check
        _
      $region10: #{tpu_custom_call.1} parent=5 // pred_check_branch
        %209 = sbr.rel (%p206) target = $region12
      $region11: #{tpu_custom_call.1} parent=5 // pred_region
        %s210 = ssub.s32 %s18, 1
        // Predicated region
        $region13: #{tpu_custom_call.1} parent=11 // pred_check
          %p211 = pneg %p65
        $region14: #{tpu_custom_call.1} parent=11 // pred_check_branch
          %213 = sbr.rel (%p211) target = $region16
        $region15: #{tpu_custom_call.1} parent=11 // pred_region
          _
        $region16: #{tpu_custom_call.1} parent=11 // pred_fallthru
          _
        // Predicated region
        $region17: #{tpu_custom_call.1} parent=11 // pred_check
          %p214 = pneg %p86
        $region18: #{tpu_custom_call.1} parent=11 // pred_check_branch
          %216 = sbr.rel (%p214) target = $region20
        $region19: #{tpu_custom_call.1} parent=11 // pred_region
          _
        $region20: #{tpu_custom_call.1} parent=11 // pred_fallthru
          _
        // Predicated region
        $region21: #{tpu_custom_call.1} parent=11 // pred_check
          %p217 = pneg %p107
        $region22: #{tpu_custom_call.1} parent=11 // pred_check_branch
          %219 = sbr.rel (%p217) target = $region24
        $region23: #{tpu_custom_call.1} parent=11 // pred_region
          %s221 = ssub.s32 8192, 8192
          %222 = vsyncadd [#allocation3], %s221
          %s223 = sshll.u32 [#allocation2], 4
          %s224 = int_to_ptr.vmem [resolvable:$true] %s223
          %229 = dma.hbm_to_vmem [thread:$0]  %s3, 8192, %s224, [#allocation3], 128, 128, 8
        $region24: #{tpu_custom_call.1} parent=11 // pred_fallthru
          _
        // Predicated region
        $region25: #{tpu_custom_call.1} parent=11 // pred_check
          %p230 = pneg %p128
        $region26: #{tpu_custom_call.1} parent=11 // pred_check_branch
          %232 = sbr.rel (%p230) target = $region28
        $region27: #{tpu_custom_call.1} parent=11 // pred_region
          _
        $region28: #{tpu_custom_call.1} parent=11 // pred_fallthru
          _
        // Predicated region
        $region29: #{tpu_custom_call.1} parent=11 // pred_check
          %p233 = pneg %p149
        $region30: #{tpu_custom_call.1} parent=11 // pred_check_branch
          %235 = sbr.rel (%p233) target = $region32
        $region31: #{tpu_custom_call.1} parent=11 // pred_region
          %s237 = ssub.s32 2048, 2048
          %238 = vsyncadd [#allocation6], %s237
          %s239 = sshll.u32 [#allocation5], 4
          %s240 = int_to_ptr.vmem [resolvable:$true] %s239
          %245 = dma.hbm_to_vmem [thread:$0]  %s5, 2048, %s240, [#allocation6], 64, 64, 4
        $region32: #{tpu_custom_call.1} parent=11 // pred_fallthru
          _
        // Predicated region
        $region33: #{tpu_custom_call.1} parent=11 // pred_check
          %p246 = pneg %p170
        $region34: #{tpu_custom_call.1} parent=11 // pred_check_branch
          %248 = sbr.rel (%p246) target = $region36
        $region35: #{tpu_custom_call.1} parent=11 // pred_region
          _
        $region36: #{tpu_custom_call.1} parent=11 // pred_fallthru
          _
      $region12: #{tpu_custom_call.1} parent=5 // pred_fallthru
        _
      %p249 = scmp.lt.s32.totalorder %s18, 4
      // Predicated region
      $region37: #{tpu_custom_call.1} parent=5 // pred_check
        %p250 = pneg %p249
      $region38: #{tpu_custom_call.1} parent=5 // pred_check_branch
        %252 = sbr.rel (%p250) target = $region40
      $region39: #{tpu_custom_call.1} parent=5 // pred_region
        // Predicated region
        $region41: #{tpu_custom_call.1} parent=39 // pred_check
          %p253 = pneg %p38
        $region42: #{tpu_custom_call.1} parent=39 // pred_check_branch
          %255 = sbr.rel (%p253) target = $region44
        $region43: #{tpu_custom_call.1} parent=39 // pred_region
          %s256 = smul.u32 4, %s18
          %s257 = ssub.s32 13, %s256
          %p258 = scmp.lt.s32.totalorder %s257, 4
          %s259 = scalar_select %p258, %s257, 4
          %s260 = smul.u32 128, %s259
          %p261 = scmp.lt.s32.totalorder %s256, 12
          %s262 = scalar_select %p261, %s256, 12
          %s263 = smul.addr %s262, 8
          %s264 = scalar_lea.vmem %s0, %s263
          %s265 = smul.u32 4, %s18
          %s266 = ssub.s32 13, %s265
          %p267 = scmp.lt.s32.totalorder %s266, 4
          %s268 = scalar_select %p267, %s266, 4
          %s269 = smul.u32 128, %s268
        $region44: #{tpu_custom_call.1} parent=39 // pred_fallthru
          _
      $region40: #{tpu_custom_call.1} parent=5 // pred_fallthru
        _
      %p270 = scmp.le.s32.totalorder 1, %s18
      %p271 = scmp.lt.s32.totalorder %s18, 5
      %p272 = pnand %p270, %p271
      %p273 = pneg %p272
      // Predicated region
      $region45: #{tpu_custom_call.1} parent=5 // pred_check
        _
      $region46: #{tpu_custom_call.1} parent=5 // pred_check_branch
        %275 = sbr.rel (%p272) target = $region48
      $region47: #{tpu_custom_call.1} parent=5 // pred_region
        %s276 = ssub.s32 %s18, 1
        // Predicated region
        $region49: #{tpu_custom_call.1} parent=47 // pred_check
          %p277 = pneg %p107
        $region50: #{tpu_custom_call.1} parent=47 // pred_check_branch
          %279 = sbr.rel (%p277) target = $region52
        $region51: #{tpu_custom_call.1} parent=47 // pred_region
          %280 = dma.done [#allocation3], 8192
        $region52: #{tpu_custom_call.1} parent=47 // pred_fallthru
          _
        // Predicated region
        $region53: #{tpu_custom_call.1} parent=47 // pred_check
          %p281 = pneg %p149
        $region54: #{tpu_custom_call.1} parent=47 // pred_check_branch
          %283 = sbr.rel (%p281) target = $region56
        $region55: #{tpu_custom_call.1} parent=47 // pred_region
          %284 = dma.done [#allocation6], 2048
        $region56: #{tpu_custom_call.1} parent=47 // pred_fallthru
          _
        %s285 = smul.u32 4, %s23
        %s286 = ssub.s32 13, %s285
        %p287 = scmp.lt.s32.totalorder %s286, 4
        %s288 = scalar_select %p287, %s286, 4
        %s289 = smul.u32 128, %s288
        %p290 = scmp.lt.s32.totalorder %s285, 12
        %s291 = scalar_select %p290, %s285, 12
        %s292 = smul.addr %s291, 8
        %s293 = scalar_lea.vmem %s0, %s292
        %p294 = pneg %p44
        %p295 = pneg %p41
        %p296 = pneg %p65
        %p297 = pneg %p62
        %p298 = pneg %p86
        %p299 = pneg %p83
        %p300 = pneg %p107
        %p301 = pneg %p104
        %p302 = pneg %p128
        %p303 = pneg %p125
        %p304 = pneg %p149
        %p305 = pneg %p146
        %p306 = pneg %p170
        %p307 = pneg %p167
        %p308 = pneg %p196
        %p309 = pneg %p193
        %s310 = sand.u32 %s183, 1
        %s311 = scalar_lea.sflag [#allocation4], %s310
        %s312 = sand.u32 %s183, 1
        %s313 = smul.addr %s312, 32
        %s314 = scalar_lea.vmem [#allocation7], %s313
        %s315 = smul.u32 4, %s23
        %s316 = ssub.s32 13, %s315
        %p317 = scmp.lt.s32.totalorder %s316, 4
        %s318 = scalar_select %p317, %s316, 4
        %s319 = smul.u32 128, %s318
        %p320 = scmp.lt.s32.totalorder %s315, 12
        %s321 = scalar_select %p320, %s315, 12
        %s322 = smul.addr %s321, 8
        %s323 = scalar_lea.vmem %s0, %s322
        %s324 = smul.u32 4, %s23
        %s325 = ssub.s32 13, %s324
        %p326 = scmp.lt.s32.totalorder %s325, 4
        %s327 = scalar_select %p326, %s325, 4
        %s328 = smul.u32 128, %s327
        %s329 = smul.u32 4, %s23
        %s330 = ssub.s32 13, %s329
        %p331 = scmp.lt.s32.totalorder %s330, 4
        %s332 = scalar_select %p331, %s330, 4
        %s333 = smul.u32 128, %s332
        %v335 = vld [vmem:[%s323] sm:$0xff]
        %v336 = vld [vmem:[%s323 + $0x8] sm:$0xff]
        %v337 = vld [vmem:[%s323 + $0x10] sm:$0xff]
        %v338 = vld [vmem:[%s323 + $0x18] sm:$0xff]
        %v339 = vpack.c.bf16 %v336, %v335
        %v340 = vpack.c.bf16 %v338, %v337
        %v341 = vld [vmem:[%s1] sm:$0xff]
        %v342 = vld [vmem:[%s1 + $0x8] sm:$0xff]
        %v343 = vld [vmem:[%s1 + $0x10] sm:$0xff]
        %v344 = vld [vmem:[%s1 + $0x18] sm:$0xff]
        %v345 = vld [vmem:[%s1 + $0x20] sm:$0xff]
        %v346 = vld [vmem:[%s1 + $0x28] sm:$0xff]
        %v347 = vld [vmem:[%s1 + $0x30] sm:$0xff]
        %v348 = vld [vmem:[%s1 + $0x38] sm:$0xff]
        %v349 = vld [vmem:[%s1 + $0x40] sm:$0xff]
        %v350 = vld [vmem:[%s1 + $0x48] sm:$0xff]
        %v351 = vld [vmem:[%s1 + $0x50] sm:$0xff]
        %v352 = vld [vmem:[%s1 + $0x58] sm:$0xff]
        %v353 = vld [vmem:[%s1 + $0x60] sm:$0xff]
        %v354 = vld [vmem:[%s1 + $0x68] sm:$0xff]
        %v355 = vld [vmem:[%s1 + $0x70] sm:$0xff]
        %v356 = vld [vmem:[%s1 + $0x78] sm:$0xff]
        %v357 = vld [vmem:[%s2] sm:$0xf]
        %v359 = vlaneseq
        %v360 = vshrl.u32 %v359, 7
        %v361 = vsub.s32 0, %v360
        %v362 = vrot.slane %v357, %v361
        %v363 = vlaneseq
        %v364 = vshrl.u32 %v363, 7
        %v365 = vsub.s32 1, %v364
        %v366 = vrot.slane %v357, %v365
        %v367 = vlaneseq
        %v368 = vshrl.u32 %v367, 7
        %v369 = vsub.s32 2, %v368
        %v370 = vrot.slane %v357, %v369
        %v371 = vlaneseq
        %v372 = vshrl.u32 %v371, 7
        %v373 = vsub.s32 3, %v372
        %v374 = vrot.slane %v357, %v373
        %v395 = vunpack.c.l.b16 %v341
        %v396 = vunpack.c.h.b16 %v341
        %v397 = vunpack.c.l.b16 %v342
        %v398 = vunpack.c.h.b16 %v342
        %v399 = vunpack.c.l.b16 %v343
        %v400 = vunpack.c.h.b16 %v343
        %v401 = vunpack.c.l.b16 %v344
        %v402 = vunpack.c.h.b16 %v344
        %v403 = vunpack.c.l.b16 %v345
        %v404 = vunpack.c.h.b16 %v345
        %v405 = vunpack.c.l.b16 %v346
        %v406 = vunpack.c.h.b16 %v346
        %v407 = vunpack.c.l.b16 %v347
        %v408 = vunpack.c.h.b16 %v347
        %v409 = vunpack.c.l.b16 %v348
        %v410 = vunpack.c.h.b16 %v348
        %v411 = vunpack.c.l.b16 %v349
        %v412 = vunpack.c.h.b16 %v349
        %v413 = vunpack.c.l.b16 %v350
        %v414 = vunpack.c.h.b16 %v350
        %v415 = vunpack.c.l.b16 %v351
        %v416 = vunpack.c.h.b16 %v351
        %v417 = vunpack.c.l.b16 %v352
        %v418 = vunpack.c.h.b16 %v352
        %v419 = vunpack.c.l.b16 %v353
        %v420 = vunpack.c.h.b16 %v353
        %v421 = vunpack.c.l.b16 %v354
        %v422 = vunpack.c.h.b16 %v354
        %v423 = vunpack.c.l.b16 %v355
        %v424 = vunpack.c.h.b16 %v355
        %v425 = vunpack.c.l.b16 %v356
        %v426 = vunpack.c.h.b16 %v356
        %v427 = vpack.c.b16 %v399, %v395
        %v428 = vpack.c.b16 %v400, %v396
        %v429 = vpack.c.b16 %v401, %v397
        %v430 = vpack.c.b16 %v402, %v398
        %v431 = vpack.c.b16 %v407, %v403
        %v432 = vpack.c.b16 %v408, %v404
        %v433 = vpack.c.b16 %v409, %v405
        %v434 = vpack.c.b16 %v410, %v406
        %v435 = vpack.c.b16 %v415, %v411
        %v436 = vpack.c.b16 %v416, %v412
        %v437 = vpack.c.b16 %v417, %v413
        %v438 = vpack.c.b16 %v418, %v414
        %v439 = vpack.c.b16 %v423, %v419
        %v440 = vpack.c.b16 %v424, %v420
        %v441 = vpack.c.b16 %v425, %v421
        %v442 = vpack.c.b16 %v426, %v422
        %vm459 = vcmask 523264
        %v461 = vsel %vm459, %v339, 0
        %v464 = vsel %vm459, %v340, 0
        %466 = vmatprep.subr.bf16.mxu0 %v428
        %467 = vmatpush1.bf16.msra.mxu0 %v427
        %468 = vmatprep.subr.bf16.mxu0 %v432
        %469 = vmatpush1.bf16.msra.mxu0 %v431
        %470 = vmatprep.subr.bf16.mxu0 %v436
        %471 = vmatpush1.bf16.msra.mxu0 %v435
        %472 = vmatprep.subr.bf16.mxu0 %v440
        %473 = vmatpush1.bf16.msra.mxu0 %v439
        %474 = vmatprep.subr.bf16.mxu0 0
        %475 = vmatpush1.bf16.msra.mxu0 0
        %476 = vmatprep.subr.bf16.mxu0 0
        %477 = vmatpush1.bf16.msra.mxu0 0
        %478 = vmatprep.subr.bf16.mxu0 0
        %479 = vmatpush1.bf16.msra.mxu0 0
        %480 = vmatprep.subr.bf16.mxu0 0
        %481 = vmatpush1.bf16.msra.mxu0 0
        %482 = vmatprep.subr.bf16.mxu0 0
        %483 = vmatpush1.bf16.msra.mxu0 0
        %484 = vmatprep.subr.bf16.mxu0 0
        %485 = vmatpush1.bf16.msra.mxu0 0
        %486 = vmatprep.subr.bf16.mxu0 0
        %487 = vmatpush1.bf16.msra.mxu0 0
        %488 = vmatprep.subr.bf16.mxu0 0
        %489 = vmatpush1.bf16.msra.mxu0 0
        %490 = vmatprep.subr.bf16.mxu0 0
        %491 = vmatpush1.bf16.msra.mxu0 0
        %492 = vmatprep.subr.bf16.mxu0 0
        %493 = vmatpush1.bf16.msra.mxu0 0
        %494 = vmatprep.subr.bf16.mxu0 0
        %495 = vmatpush1.bf16.msra.mxu0 0
        %496 = vmatprep.subr.bf16.mxu0 0
        %497 = vmatpush1.bf16.msra.mxu0 0
        %498 = vmatprep.mubr.bf16.mxu0 0
        %499 = vmatmul.mubr.bf16.gmra.mrb[0].mxu0 %v461
        %v500 = vpop.f32.mrb[0].mxu0
        %v501 = vadd.f32 %v362, %v500
        %v502 = vpop.f32.mrb[0].mxu0
        %v503 = vadd.f32 %v366, %v502
        %v504 = vpop.f32.mrb[0].mxu0
        %v505 = vadd.f32 %v362, %v504
        %v506 = vpop.f32.mrb[0].mxu0
        %v507 = vadd.f32 %v366, %v506
        %508 = vmatprep.mubr.bf16.mxu0 0
        %509 = vmatmul.mubr.bf16.gmra.mrb[0].mxu0 %v464
        %v510 = vpop.f32.mrb[0].mxu0
        %v511 = vadd.f32 %v362, %v510
        %v512 = vpop.f32.mrb[0].mxu0
        %v513 = vadd.f32 %v366, %v512
        %v514 = vpop.f32.mrb[0].mxu0
        %v515 = vadd.f32 %v362, %v514
        %v516 = vpop.f32.mrb[0].mxu0
        %v517 = vadd.f32 %v366, %v516
        %518 = vdwg.mxu0
        %519 = vmatprep.subr.bf16.mxu0 %v430
        %520 = vmatpush1.bf16.msra.mxu0 %v429
        %521 = vmatprep.subr.bf16.mxu0 %v434
        %522 = vmatpush1.bf16.msra.mxu0 %v433
        %523 = vmatprep.subr.bf16.mxu0 %v438
        %524 = vmatpush1.bf16.msra.mxu0 %v437
        %525 = vmatprep.subr.bf16.mxu0 %v442
        %526 = vmatpush1.bf16.msra.mxu0 %v441
        %527 = vmatprep.subr.bf16.mxu0 0
        %528 = vmatpush1.bf16.msra.mxu0 0
        %529 = vmatprep.subr.bf16.mxu0 0
        %530 = vmatpush1.bf16.msra.mxu0 0
        %531 = vmatprep.subr.bf16.mxu0 0
        %532 = vmatpush1.bf16.msra.mxu0 0
        %533 = vmatprep.subr.bf16.mxu0 0
        %534 = vmatpush1.bf16.msra.mxu0 0
        %535 = vmatprep.subr.bf16.mxu0 0
        %536 = vmatpush1.bf16.msra.mxu0 0
        %537 = vmatprep.subr.bf16.mxu0 0
        %538 = vmatpush1.bf16.msra.mxu0 0
        %539 = vmatprep.subr.bf16.mxu0 0
        %540 = vmatpush1.bf16.msra.mxu0 0
        %541 = vmatprep.subr.bf16.mxu0 0
        %542 = vmatpush1.bf16.msra.mxu0 0
        %543 = vmatprep.subr.bf16.mxu0 0
        %544 = vmatpush1.bf16.msra.mxu0 0
        %545 = vmatprep.subr.bf16.mxu0 0
        %546 = vmatpush1.bf16.msra.mxu0 0
        %547 = vmatprep.subr.bf16.mxu0 0
        %548 = vmatpush1.bf16.msra.mxu0 0
        %549 = vmatprep.subr.bf16.mxu0 0
        %550 = vmatpush1.bf16.msra.mxu0 0
        %551 = vmatprep.mubr.bf16.mxu0 0
        %552 = vmatmul.mubr.bf16.gmra.mrb[0].mxu0 %v461
        %v553 = vpop.f32.mrb[0].mxu0
        %v554 = vadd.f32 %v370, %v553
        %v555 = vpop.f32.mrb[0].mxu0
        %v556 = vadd.f32 %v374, %v555
        %v557 = vpop.f32.mrb[0].mxu0
        %v558 = vadd.f32 %v370, %v557
        %v559 = vpop.f32.mrb[0].mxu0
        %v560 = vadd.f32 %v374, %v559
        %561 = vmatprep.mubr.bf16.mxu0 0
        %562 = vmatmul.mubr.bf16.gmra.mrb[0].mxu0 %v464
        %v563 = vpop.f32.mrb[0].mxu0
        %v564 = vadd.f32 %v370, %v563
        %v565 = vpop.f32.mrb[0].mxu0
        %v566 = vadd.f32 %v374, %v565
        %v567 = vpop.f32.mrb[0].mxu0
        %v568 = vadd.f32 %v370, %v567
        %v569 = vpop.f32.mrb[0].mxu0
        %v570 = vadd.f32 %v374, %v569
        %571 = vdwg.mxu0
        %v572 = vmax.f32 %v501, 0.0
        %v573 = vmax.f32 %v503, 0.0
        %v574 = vmax.f32 %v554, 0.0
        %v575 = vmax.f32 %v556, 0.0
        %v576 = vmax.f32 %v505, 0.0
        %v577 = vmax.f32 %v507, 0.0
        %v578 = vmax.f32 %v558, 0.0
        %v579 = vmax.f32 %v560, 0.0
        %v580 = vmax.f32 %v511, 0.0
        %v581 = vmax.f32 %v513, 0.0
        %v582 = vmax.f32 %v564, 0.0
        %v583 = vmax.f32 %v566, 0.0
        %v584 = vmax.f32 %v515, 0.0
        %v585 = vmax.f32 %v517, 0.0
        %v586 = vmax.f32 %v568, 0.0
        %v587 = vmax.f32 %v570, 0.0
        %v588 = vpack.c.bf16 %v576, %v572
        %v589 = vpack.c.bf16 %v577, %v573
        %v590 = vpack.c.bf16 %v578, %v574
        %v591 = vpack.c.bf16 %v579, %v575
        %v592 = vpack.c.bf16 %v584, %v580
        %v593 = vpack.c.bf16 %v585, %v581
        %v594 = vpack.c.bf16 %v586, %v582
        %v595 = vpack.c.bf16 %v587, %v583
        %v596 = vld [vmem:[#allocation2] sm:$0xff]
        %v597 = vld [vmem:[#allocation2 + $0x8] sm:$0xff]
        %v598 = vld [vmem:[#allocation2 + $0x10] sm:$0xff]
        %v599 = vld [vmem:[#allocation2 + $0x18] sm:$0xff]
        %v600 = vld [vmem:[#allocation2 + $0x20] sm:$0xff]
        %v601 = vld [vmem:[#allocation2 + $0x28] sm:$0xff]
        %v602 = vld [vmem:[#allocation2 + $0x30] sm:$0xff]
        %v603 = vld [vmem:[#allocation2 + $0x38] sm:$0xff]
        %v604 = vld [vmem:[#allocation2 + $0x40] sm:$0xff]
        %v605 = vld [vmem:[#allocation2 + $0x48] sm:$0xff]
        %v606 = vld [vmem:[#allocation2 + $0x50] sm:$0xff]
        %v607 = vld [vmem:[#allocation2 + $0x58] sm:$0xff]
        %v608 = vld [vmem:[#allocation2 + $0x60] sm:$0xff]
        %v609 = vld [vmem:[#allocation2 + $0x68] sm:$0xff]
        %v610 = vld [vmem:[#allocation2 + $0x70] sm:$0xff]
        %v611 = vld [vmem:[#allocation2 + $0x78] sm:$0xff]
        %v612 = vld [vmem:[#allocation2 + $0x80] sm:$0xff]
        %v613 = vld [vmem:[#allocation2 + $0x88] sm:$0xff]
        %v614 = vld [vmem:[#allocation2 + $0x90] sm:$0xff]
        %v615 = vld [vmem:[#allocation2 + $0x98] sm:$0xff]
        %v616 = vld [vmem:[#allocation2 + $0xa0] sm:$0xff]
        %v617 = vld [vmem:[#allocation2 + $0xa8] sm:$0xff]
        %v618 = vld [vmem:[#allocation2 + $0xb0] sm:$0xff]
        %v619 = vld [vmem:[#allocation2 + $0xb8] sm:$0xff]
        %v620 = vld [vmem:[#allocation2 + $0xc0] sm:$0xff]
        %v621 = vld [vmem:[#allocation2 + $0xc8] sm:$0xff]
        %v622 = vld [vmem:[#allocation2 + $0xd0] sm:$0xff]
        %v623 = vld [vmem:[#allocation2 + $0xd8] sm:$0xff]
        %v624 = vld [vmem:[#allocation2 + $0xe0] sm:$0xff]
        %v625 = vld [vmem:[#allocation2 + $0xe8] sm:$0xff]
        %v626 = vld [vmem:[#allocation2 + $0xf0] sm:$0xff]
        %v627 = vld [vmem:[#allocation2 + $0xf8] sm:$0xff]
        %v628 = vld [vmem:[#allocation2 + $0x100] sm:$0xff]
        %v629 = vld [vmem:[#allocation2 + $0x108] sm:$0xff]
        %v630 = vld [vmem:[#allocation2 + $0x110] sm:$0xff]
        %v631 = vld [vmem:[#allocation2 + $0x118] sm:$0xff]
        %v632 = vld [vmem:[#allocation2 + $0x120] sm:$0xff]
        %v633 = vld [vmem:[#allocation2 + $0x128] sm:$0xff]
        %v634 = vld [vmem:[#allocation2 + $0x130] sm:$0xff]
        %v635 = vld [vmem:[#allocation2 + $0x138] sm:$0xff]
        %v636 = vld [vmem:[#allocation2 + $0x140] sm:$0xff]
        %v637 = vld [vmem:[#allocation2 + $0x148] sm:$0xff]
        %v638 = vld [vmem:[#allocation2 + $0x150] sm:$0xff]
        %v639 = vld [vmem:[#allocation2 + $0x158] sm:$0xff]
        %v640 = vld [vmem:[#allocation2 + $0x160] sm:$0xff]
        %v641 = vld [vmem:[#allocation2 + $0x168] sm:$0xff]
        %v642 = vld [vmem:[#allocation2 + $0x170] sm:$0xff]
        %v643 = vld [vmem:[#allocation2 + $0x178] sm:$0xff]
        %v644 = vld [vmem:[#allocation2 + $0x180] sm:$0xff]
        %v645 = vld [vmem:[#allocation2 + $0x188] sm:$0xff]
        %v646 = vld [vmem:[#allocation2 + $0x190] sm:$0xff]
        %v647 = vld [vmem:[#allocation2 + $0x198] sm:$0xff]
        %v648 = vld [vmem:[#allocation2 + $0x1a0] sm:$0xff]
        %v649 = vld [vmem:[#allocation2 + $0x1a8] sm:$0xff]
        %v650 = vld [vmem:[#allocation2 + $0x1b0] sm:$0xff]
        %v651 = vld [vmem:[#allocation2 + $0x1b8] sm:$0xff]
        %v652 = vld [vmem:[#allocation2 + $0x1c0] sm:$0xff]
        %v653 = vld [vmem:[#allocation2 + $0x1c8] sm:$0xff]
        %v654 = vld [vmem:[#allocation2 + $0x1d0] sm:$0xff]
        %v655 = vld [vmem:[#allocation2 + $0x1d8] sm:$0xff]
        %v656 = vld [vmem:[#allocation2 + $0x1e0] sm:$0xff]
        %v657 = vld [vmem:[#allocation2 + $0x1e8] sm:$0xff]
        %v658 = vld [vmem:[#allocation2 + $0x1f0] sm:$0xff]
        %v659 = vld [vmem:[#allocation2 + $0x1f8] sm:$0xff]
        %v660 = vld [vmem:[%s4] sm:$0x3]
        %v662 = vlaneseq
        %v663 = vshrl.u32 %v662, 7
        %v664 = vsub.s32 0, %v663
        %v665 = vrot.slane %v660, %v664
        %v666 = vlaneseq
        %v667 = vshrl.u32 %v666, 7
        %v668 = vsub.s32 1, %v667
        %v669 = vrot.slane %v660, %v668
        %v736 = vunpack.c.l.b16 %v596
        %v737 = vunpack.c.h.b16 %v596
        %v738 = vunpack.c.l.b16 %v597
        %v739 = vunpack.c.h.b16 %v597
        %v740 = vunpack.c.l.b16 %v598
        %v741 = vunpack.c.h.b16 %v598
        %v742 = vunpack.c.l.b16 %v599
        %v743 = vunpack.c.h.b16 %v599
        %v744 = vunpack.c.l.b16 %v600
        %v745 = vunpack.c.h.b16 %v600
        %v746 = vunpack.c.l.b16 %v601
        %v747 = vunpack.c.h.b16 %v601
        %v748 = vunpack.c.l.b16 %v602
        %v749 = vunpack.c.h.b16 %v602
        %v750 = vunpack.c.l.b16 %v603
        %v751 = vunpack.c.h.b16 %v603
        %v752 = vunpack.c.l.b16 %v604
        %v753 = vunpack.c.h.b16 %v604
        %v754 = vunpack.c.l.b16 %v605
        %v755 = vunpack.c.h.b16 %v605
        %v756 = vunpack.c.l.b16 %v606
        %v757 = vunpack.c.h.b16 %v606
        %v758 = vunpack.c.l.b16 %v607
        %v759 = vunpack.c.h.b16 %v607
        %v760 = vunpack.c.l.b16 %v608
        %v761 = vunpack.c.h.b16 %v608
        %v762 = vunpack.c.l.b16 %v609
        %v763 = vunpack.c.h.b16 %v609
        %v764 = vunpack.c.l.b16 %v610
        %v765 = vunpack.c.h.b16 %v610
        %v766 = vunpack.c.l.b16 %v611
        %v767 = vunpack.c.h.b16 %v611
        %v768 = vunpack.c.l.b16 %v612
        %v769 = vunpack.c.h.b16 %v612
        %v770 = vunpack.c.l.b16 %v613
        %v771 = vunpack.c.h.b16 %v613
        %v772 = vunpack.c.l.b16 %v614
        %v773 = vunpack.c.h.b16 %v614
        %v774 = vunpack.c.l.b16 %v615
        %v775 = vunpack.c.h.b16 %v615
        %v776 = vunpack.c.l.b16 %v616
        %v777 = vunpack.c.h.b16 %v616
        %v778 = vunpack.c.l.b16 %v617
        %v779 = vunpack.c.h.b16 %v617
        %v780 = vunpack.c.l.b16 %v618
        %v781 = vunpack.c.h.b16 %v618
        %v782 = vunpack.c.l.b16 %v619
        %v783 = vunpack.c.h.b16 %v619
        %v784 = vunpack.c.l.b16 %v620
        %v785 = vunpack.c.h.b16 %v620
        %v786 = vunpack.c.l.b16 %v621
        %v787 = vunpack.c.h.b16 %v621
        %v788 = vunpack.c.l.b16 %v622
        %v789 = vunpack.c.h.b16 %v622
        %v790 = vunpack.c.l.b16 %v623
        %v791 = vunpack.c.h.b16 %v623
        %v792 = vunpack.c.l.b16 %v624
        %v793 = vunpack.c.h.b16 %v624
        %v794 = vunpack.c.l.b16 %v625
        %v795 = vunpack.c.h.b16 %v625
        %v796 = vunpack.c.l.b16 %v626
        %v797 = vunpack.c.h.b16 %v626
        %v798 = vunpack.c.l.b16 %v627
        %v799 = vunpack.c.h.b16 %v627
        %v800 = vunpack.c.l.b16 %v628
        %v801 = vunpack.c.h.b16 %v628
        %v802 = vunpack.c.l.b16 %v629
        %v803 = vunpack.c.h.b16 %v629
        %v804 = vunpack.c.l.b16 %v630
        %v805 = vunpack.c.h.b16 %v630
        %v806 = vunpack.c.l.b16 %v631
        %v807 = vunpack.c.h.b16 %v631
        %v808 = vunpack.c.l.b16 %v632
        %v809 = vunpack.c.h.b16 %v632
        %v810 = vunpack.c.l.b16 %v633
        %v811 = vunpack.c.h.b16 %v633
        %v812 = vunpack.c.l.b16 %v634
        %v813 = vunpack.c.h.b16 %v634
        %v814 = vunpack.c.l.b16 %v635
        %v815 = vunpack.c.h.b16 %v635
        %v816 = vunpack.c.l.b16 %v636
        %v817 = vunpack.c.h.b16 %v636
        %v818 = vunpack.c.l.b16 %v637
        %v819 = vunpack.c.h.b16 %v637
        %v820 = vunpack.c.l.b16 %v638
        %v821 = vunpack.c.h.b16 %v638
        %v822 = vunpack.c.l.b16 %v639
        %v823 = vunpack.c.h.b16 %v639
        %v824 = vunpack.c.l.b16 %v640
        %v825 = vunpack.c.h.b16 %v640
        %v826 = vunpack.c.l.b16 %v641
        %v827 = vunpack.c.h.b16 %v641
        %v828 = vunpack.c.l.b16 %v642
        %v829 = vunpack.c.h.b16 %v642
        %v830 = vunpack.c.l.b16 %v643
        %v831 = vunpack.c.h.b16 %v643
        %v832 = vunpack.c.l.b16 %v644
        %v833 = vunpack.c.h.b16 %v644
        %v834 = vunpack.c.l.b16 %v645
        %v835 = vunpack.c.h.b16 %v645
        %v836 = vunpack.c.l.b16 %v646
        %v837 = vunpack.c.h.b16 %v646
        %v838 = vunpack.c.l.b16 %v647
        %v839 = vunpack.c.h.b16 %v647
        %v840 = vunpack.c.l.b16 %v648
        %v841 = vunpack.c.h.b16 %v648
        %v842 = vunpack.c.l.b16 %v649
        %v843 = vunpack.c.h.b16 %v649
        %v844 = vunpack.c.l.b16 %v650
        %v845 = vunpack.c.h.b16 %v650
        %v846 = vunpack.c.l.b16 %v651
        %v847 = vunpack.c.h.b16 %v651
        %v848 = vunpack.c.l.b16 %v652
        %v849 = vunpack.c.h.b16 %v652
        %v850 = vunpack.c.l.b16 %v653
        %v851 = vunpack.c.h.b16 %v653
        %v852 = vunpack.c.l.b16 %v654
        %v853 = vunpack.c.h.b16 %v654
        %v854 = vunpack.c.l.b16 %v655
        %v855 = vunpack.c.h.b16 %v655
        %v856 = vunpack.c.l.b16 %v656
        %v857 = vunpack.c.h.b16 %v656
        %v858 = vunpack.c.l.b16 %v657
        %v859 = vunpack.c.h.b16 %v657
        %v860 = vunpack.c.l.b16 %v658
        %v861 = vunpack.c.h.b16 %v658
        %v862 = vunpack.c.l.b16 %v659
        %v863 = vunpack.c.h.b16 %v659
        %v864 = vpack.c.b16 %v738, %v736
        %v865 = vpack.c.b16 %v739, %v737
        %v866 = vpack.c.b16 %v742, %v740
        %v867 = vpack.c.b16 %v743, %v741
        %v868 = vpack.c.b16 %v746, %v744
        %v869 = vpack.c.b16 %v747, %v745
        %v870 = vpack.c.b16 %v750, %v748
        %v871 = vpack.c.b16 %v751, %v749
        %v872 = vpack.c.b16 %v754, %v752
        %v873 = vpack.c.b16 %v755, %v753
        %v874 = vpack.c.b16 %v758, %v756
        %v875 = vpack.c.b16 %v759, %v757
        %v876 = vpack.c.b16 %v762, %v760
        %v877 = vpack.c.b16 %v763, %v761
        %v878 = vpack.c.b16 %v766, %v764
        %v879 = vpack.c.b16 %v767, %v765
        %v880 = vpack.c.b16 %v770, %v768
        %v881 = vpack.c.b16 %v771, %v769
        %v882 = vpack.c.b16 %v774, %v772
        %v883 = vpack.c.b16 %v775, %v773
        %v884 = vpack.c.b16 %v778, %v776
        %v885 = vpack.c.b16 %v779, %v777
        %v886 = vpack.c.b16 %v782, %v780
        %v887 = vpack.c.b16 %v783, %v781
        %v888 = vpack.c.b16 %v786, %v784
        %v889 = vpack.c.b16 %v787, %v785
        %v890 = vpack.c.b16 %v790, %v788
        %v891 = vpack.c.b16 %v791, %v789
        %v892 = vpack.c.b16 %v794, %v792
        %v893 = vpack.c.b16 %v795, %v793
        %v894 = vpack.c.b16 %v798, %v796
        %v895 = vpack.c.b16 %v799, %v797
        %v896 = vpack.c.b16 %v802, %v800
        %v897 = vpack.c.b16 %v803, %v801
        %v898 = vpack.c.b16 %v806, %v804
        %v899 = vpack.c.b16 %v807, %v805
        %v900 = vpack.c.b16 %v810, %v808
        %v901 = vpack.c.b16 %v811, %v809
        %v902 = vpack.c.b16 %v814, %v812
        %v903 = vpack.c.b16 %v815, %v813
        %v904 = vpack.c.b16 %v818, %v816
        %v905 = vpack.c.b16 %v819, %v817
        %v906 = vpack.c.b16 %v822, %v820
        %v907 = vpack.c.b16 %v823, %v821
        %v908 = vpack.c.b16 %v826, %v824
        %v909 = vpack.c.b16 %v827, %v825
        %v910 = vpack.c.b16 %v830, %v828
        %v911 = vpack.c.b16 %v831, %v829
        %v912 = vpack.c.b16 %v834, %v832
        %v913 = vpack.c.b16 %v835, %v833
        %v914 = vpack.c.b16 %v838, %v836
        %v915 = vpack.c.b16 %v839, %v837
        %v916 = vpack.c.b16 %v842, %v840
        %v917 = vpack.c.b16 %v843, %v841
        %v918 = vpack.c.b16 %v846, %v844
        %v919 = vpack.c.b16 %v847, %v845
        %v920 = vpack.c.b16 %v850, %v848
        %v921 = vpack.c.b16 %v851, %v849
        %v922 = vpack.c.b16 %v854, %v852
        %v923 = vpack.c.b16 %v855, %v853
        %v924 = vpack.c.b16 %v858, %v856
        %v925 = vpack.c.b16 %v859, %v857
        %v926 = vpack.c.b16 %v862, %v860
        %v927 = vpack.c.b16 %v863, %v861
        %992 = vmatprep.subr.bf16.mxu0 %v865
        %993 = vmatpush1.bf16.msra.mxu0 %v864
        %994 = vmatprep.subr.bf16.mxu0 %v867
        %995 = vmatpush1.bf16.msra.mxu0 %v866
        %996 = vmatprep.subr.bf16.mxu0 %v869
        %997 = vmatpush1.bf16.msra.mxu0 %v868
        %998 = vmatprep.subr.bf16.mxu0 %v871
        %999 = vmatpush1.bf16.msra.mxu0 %v870
        %1000 = vmatprep.subr.bf16.mxu0 %v873
        %1001 = vmatpush1.bf16.msra.mxu0 %v872
        %1002 = vmatprep.subr.bf16.mxu0 %v875
        %1003 = vmatpush1.bf16.msra.mxu0 %v874
        %1004 = vmatprep.subr.bf16.mxu0 %v877
        %1005 = vmatpush1.bf16.msra.mxu0 %v876
        %1006 = vmatprep.subr.bf16.mxu0 %v879
        %1007 = vmatpush1.bf16.msra.mxu0 %v878
        %1008 = vmatprep.subr.bf16.mxu0 %v881
        %1009 = vmatpush1.bf16.msra.mxu0 %v880
        %1010 = vmatprep.subr.bf16.mxu0 %v883
        %1011 = vmatpush1.bf16.msra.mxu0 %v882
        %1012 = vmatprep.subr.bf16.mxu0 %v885
        %1013 = vmatpush1.bf16.msra.mxu0 %v884
        %1014 = vmatprep.subr.bf16.mxu0 %v887
        %1015 = vmatpush1.bf16.msra.mxu0 %v886
        %1016 = vmatprep.subr.bf16.mxu0 %v889
        %1017 = vmatpush1.bf16.msra.mxu0 %v888
        %1018 = vmatprep.subr.bf16.mxu0 %v891
        %1019 = vmatpush1.bf16.msra.mxu0 %v890
        %1020 = vmatprep.subr.bf16.mxu0 %v893
        %1021 = vmatpush1.bf16.msra.mxu0 %v892
        %1022 = vmatprep.subr.bf16.mxu0 %v895
        %1023 = vmatpush1.bf16.msra.mxu0 %v894
        %1024 = vmatprep.mubr.bf16.mxu0 %v589
        %1025 = vmatmul.mubr.bf16.gmra.mrb[0].mxu0 %v588
        %v1026 = vpop.f32.mrb[0].mxu0
        %v1027 = vadd.f32 %v665, %v1026
        %v1028 = vpop.f32.mrb[0].mxu0
        %v1029 = vadd.f32 %v669, %v1028
        %v1030 = vpop.f32.mrb[0].mxu0
        %v1031 = vadd.f32 %v665, %v1030
        %v1032 = vpop.f32.mrb[0].mxu0
        %v1033 = vadd.f32 %v669, %v1032
        %1034 = vmatprep.mubr.bf16.mxu0 %v593
        %1035 = vmatmul.mubr.bf16.gmra.mrb[0].mxu0 %v592
        %v1036 = vpop.f32.mrb[0].mxu0
        %v1037 = vadd.f32 %v665, %v1036
        %v1038 = vpop.f32.mrb[0].mxu0
        %v1039 = vadd.f32 %v669, %v1038
        %v1040 = vpop.f32.mrb[0].mxu0
        %v1041 = vadd.f32 %v665, %v1040
        %v1042 = vpop.f32.mrb[0].mxu0
        %v1043 = vadd.f32 %v669, %v1042
        %1044 = vdwg.mxu0
        %1045 = vmatprep.subr.bf16.mxu0 %v897
        %1046 = vmatpush1.bf16.msra.mxu0 %v896
        %1047 = vmatprep.subr.bf16.mxu0 %v899
        %1048 = vmatpush1.bf16.msra.mxu0 %v898
        %1049 = vmatprep.subr.bf16.mxu0 %v901
        %1050 = vmatpush1.bf16.msra.mxu0 %v900
        %1051 = vmatprep.subr.bf16.mxu0 %v903
        %1052 = vmatpush1.bf16.msra.mxu0 %v902
        %1053 = vmatprep.subr.bf16.mxu0 %v905
        %1054 = vmatpush1.bf16.msra.mxu0 %v904
        %1055 = vmatprep.subr.bf16.mxu0 %v907
        %1056 = vmatpush1.bf16.msra.mxu0 %v906
        %1057 = vmatprep.subr.bf16.mxu0 %v909
        %1058 = vmatpush1.bf16.msra.mxu0 %v908
        %1059 = vmatprep.subr.bf16.mxu0 %v911
        %1060 = vmatpush1.bf16.msra.mxu0 %v910
        %1061 = vmatprep.subr.bf16.mxu0 %v913
        %1062 = vmatpush1.bf16.msra.mxu0 %v912
        %1063 = vmatprep.subr.bf16.mxu0 %v915
        %1064 = vmatpush1.bf16.msra.mxu0 %v914
        %1065 = vmatprep.subr.bf16.mxu0 %v917
        %1066 = vmatpush1.bf16.msra.mxu0 %v916
        %1067 = vmatprep.subr.bf16.mxu0 %v919
        %1068 = vmatpush1.bf16.msra.mxu0 %v918
        %1069 = vmatprep.subr.bf16.mxu0 %v921
        %1070 = vmatpush1.bf16.msra.mxu0 %v920
        %1071 = vmatprep.subr.bf16.mxu0 %v923
        %1072 = vmatpush1.bf16.msra.mxu0 %v922
        %1073 = vmatprep.subr.bf16.mxu0 %v925
        %1074 = vmatpush1.bf16.msra.mxu0 %v924
        %1075 = vmatprep.subr.bf16.mxu0 %v927
        %1076 = vmatpush1.bf16.msra.mxu0 %v926
        %1077 = vmatprep.mubr.bf16.mxu0 %v591
        %1078 = vmatmul.mubr.bf16.gmra.mrb[0].mxu0 %v590
        %v1079 = vpop.f32.mrb[0].mxu0
        %v1080 = vadd.f32 %v1027, %v1079
        %v1081 = vpop.f32.mrb[0].mxu0
        %v1082 = vadd.f32 %v1029, %v1081
        %v1083 = vpop.f32.mrb[0].mxu0
        %v1084 = vadd.f32 %v1031, %v1083
        %v1085 = vpop.f32.mrb[0].mxu0
        %v1086 = vadd.f32 %v1033, %v1085
        %1087 = vmatprep.mubr.bf16.mxu0 %v595
        %1088 = vmatmul.mubr.bf16.gmra.mrb[0].mxu0 %v594
        %v1089 = vpop.f32.mrb[0].mxu0
        %v1090 = vadd.f32 %v1037, %v1089
        %v1091 = vpop.f32.mrb[0].mxu0
        %v1092 = vadd.f32 %v1039, %v1091
        %v1093 = vpop.f32.mrb[0].mxu0
        %v1094 = vadd.f32 %v1041, %v1093
        %v1095 = vpop.f32.mrb[0].mxu0
        %v1096 = vadd.f32 %v1043, %v1095
        %1097 = vdwg.mxu0
        %v1098 = vmax.f32 %v1080, 0.0
        %v1099 = vmax.f32 %v1082, 0.0
        %v1100 = vmax.f32 %v1084, 0.0
        %v1101 = vmax.f32 %v1086, 0.0
        %v1102 = vmax.f32 %v1090, 0.0
        %v1103 = vmax.f32 %v1092, 0.0
        %v1104 = vmax.f32 %v1094, 0.0
        %v1105 = vmax.f32 %v1096, 0.0
        %v1106 = vpack.c.bf16 %v1100, %v1098
        %v1107 = vpack.c.bf16 %v1101, %v1099
        %v1108 = vpack.c.bf16 %v1104, %v1102
        %v1109 = vpack.c.bf16 %v1105, %v1103
        %v1110 = vld [vmem:[#allocation5] sm:$0xf]
        %v1111 = vld [vmem:[#allocation5 + $0x4] sm:$0xf]
        %v1112 = vld [vmem:[#allocation5 + $0x8] sm:$0xf]
        %v1113 = vld [vmem:[#allocation5 + $0xc] sm:$0xf]
        %v1114 = vld [vmem:[#allocation5 + $0x10] sm:$0xf]
        %v1115 = vld [vmem:[#allocation5 + $0x14] sm:$0xf]
        %v1116 = vld [vmem:[#allocation5 + $0x18] sm:$0xf]
        %v1117 = vld [vmem:[#allocation5 + $0x1c] sm:$0xf]
        %v1118 = vld [vmem:[#allocation5 + $0x20] sm:$0xf]
        %v1119 = vld [vmem:[#allocation5 + $0x24] sm:$0xf]
        %v1120 = vld [vmem:[#allocation5 + $0x28] sm:$0xf]
        %v1121 = vld [vmem:[#allocation5 + $0x2c] sm:$0xf]
        %v1122 = vld [vmem:[#allocation5 + $0x30] sm:$0xf]
        %v1123 = vld [vmem:[#allocation5 + $0x34] sm:$0xf]
        %v1124 = vld [vmem:[#allocation5 + $0x38] sm:$0xf]
        %v1125 = vld [vmem:[#allocation5 + $0x3c] sm:$0xf]
        %v1126 = vld [vmem:[#allocation5 + $0x40] sm:$0xf]
        %v1127 = vld [vmem:[#allocation5 + $0x44] sm:$0xf]
        %v1128 = vld [vmem:[#allocation5 + $0x48] sm:$0xf]
        %v1129 = vld [vmem:[#allocation5 + $0x4c] sm:$0xf]
        %v1130 = vld [vmem:[#allocation5 + $0x50] sm:$0xf]
        %v1131 = vld [vmem:[#allocation5 + $0x54] sm:$0xf]
        %v1132 = vld [vmem:[#allocation5 + $0x58] sm:$0xf]
        %v1133 = vld [vmem:[#allocation5 + $0x5c] sm:$0xf]
        %v1134 = vld [vmem:[#allocation5 + $0x60] sm:$0xf]
        %v1135 = vld [vmem:[#allocation5 + $0x64] sm:$0xf]
        %v1136 = vld [vmem:[#allocation5 + $0x68] sm:$0xf]
        %v1137 = vld [vmem:[#allocation5 + $0x6c] sm:$0xf]
        %v1138 = vld [vmem:[#allocation5 + $0x70] sm:$0xf]
        %v1139 = vld [vmem:[#allocation5 + $0x74] sm:$0xf]
        %v1140 = vld [vmem:[#allocation5 + $0x78] sm:$0xf]
        %v1141 = vld [vmem:[#allocation5 + $0x7c] sm:$0xf]
        %v1142 = vld [vmem:[%s6] sm:$0x1]
        %v1144 = vlaneseq
        %v1145 = vshrl.u32 %v1144, 7
        %v1146 = vsub.s32 0, %v1145
        %v1147 = vrot.slane %v1142, %v1146
        %v1181 = vunpack.c.l.b16 %v1110
        %v1182 = vunpack.c.l.b16 %v1111
        %v1183 = vunpack.c.l.b16 %v1112
        %v1184 = vunpack.c.l.b16 %v1113
        %v1185 = vunpack.c.l.b16 %v1114
        %v1186 = vunpack.c.l.b16 %v1115
        %v1187 = vunpack.c.l.b16 %v1116
        %v1188 = vunpack.c.l.b16 %v1117
        %v1189 = vunpack.c.l.b16 %v1118
        %v1190 = vunpack.c.l.b16 %v1119
        %v1191 = vunpack.c.l.b16 %v1120
        %v1192 = vunpack.c.l.b16 %v1121
        %v1193 = vunpack.c.l.b16 %v1122
        %v1194 = vunpack.c.l.b16 %v1123
        %v1195 = vunpack.c.l.b16 %v1124
        %v1196 = vunpack.c.l.b16 %v1125
        %v1197 = vunpack.c.l.b16 %v1126
        %v1198 = vunpack.c.l.b16 %v1127
        %v1199 = vunpack.c.l.b16 %v1128
        %v1200 = vunpack.c.l.b16 %v1129
        %v1201 = vunpack.c.l.b16 %v1130
        %v1202 = vunpack.c.l.b16 %v1131
        %v1203 = vunpack.c.l.b16 %v1132
        %v1204 = vunpack.c.l.b16 %v1133
        %v1205 = vunpack.c.l.b16 %v1134
        %v1206 = vunpack.c.l.b16 %v1135
        %v1207 = vunpack.c.l.b16 %v1136
        %v1208 = vunpack.c.l.b16 %v1137
        %v1209 = vunpack.c.l.b16 %v1138
        %v1210 = vunpack.c.l.b16 %v1139
        %v1211 = vunpack.c.l.b16 %v1140
        %v1212 = vunpack.c.l.b16 %v1141
        %v1213 = vpack.c.b16 %v1182, %v1181
        %v1214 = vpack.c.b16 %v1184, %v1183
        %v1215 = vpack.c.b16 %v1186, %v1185
        %v1216 = vpack.c.b16 %v1188, %v1187
        %v1217 = vpack.c.b16 %v1190, %v1189
        %v1218 = vpack.c.b16 %v1192, %v1191
        %v1219 = vpack.c.b16 %v1194, %v1193
        %v1220 = vpack.c.b16 %v1196, %v1195
        %v1221 = vpack.c.b16 %v1198, %v1197
        %v1222 = vpack.c.b16 %v1200, %v1199
        %v1223 = vpack.c.b16 %v1202, %v1201
        %v1224 = vpack.c.b16 %v1204, %v1203
        %v1225 = vpack.c.b16 %v1206, %v1205
        %v1226 = vpack.c.b16 %v1208, %v1207
        %v1227 = vpack.c.b16 %v1210, %v1209
        %v1228 = vpack.c.b16 %v1212, %v1211
        %1245 = vmatprep.subr.bf16.mxu0 0
        %1246 = vmatpush1.bf16.msra.mxu0 %v1213
        %1247 = vmatprep.subr.bf16.mxu0 0
        %1248 = vmatpush1.bf16.msra.mxu0 %v1214
        %1249 = vmatprep.subr.bf16.mxu0 0
        %1250 = vmatpush1.bf16.msra.mxu0 %v1215
        %1251 = vmatprep.subr.bf16.mxu0 0
        %1252 = vmatpush1.bf16.msra.mxu0 %v1216
        %1253 = vmatprep.subr.bf16.mxu0 0
        %1254 = vmatpush1.bf16.msra.mxu0 %v1217
        %1255 = vmatprep.subr.bf16.mxu0 0
        %1256 = vmatpush1.bf16.msra.mxu0 %v1218
        %1257 = vmatprep.subr.bf16.mxu0 0
        %1258 = vmatpush1.bf16.msra.mxu0 %v1219
        %1259 = vmatprep.subr.bf16.mxu0 0
        %1260 = vmatpush1.bf16.msra.mxu0 %v1220
        %1261 = vmatprep.subr.bf16.mxu0 0
        %1262 = vmatpush1.bf16.msra.mxu0 %v1221
        %1263 = vmatprep.subr.bf16.mxu0 0
        %1264 = vmatpush1.bf16.msra.mxu0 %v1222
        %1265 = vmatprep.subr.bf16.mxu0 0
        %1266 = vmatpush1.bf16.msra.mxu0 %v1223
        %1267 = vmatprep.subr.bf16.mxu0 0
        %1268 = vmatpush1.bf16.msra.mxu0 %v1224
        %1269 = vmatprep.subr.bf16.mxu0 0
        %1270 = vmatpush1.bf16.msra.mxu0 %v1225
        %1271 = vmatprep.subr.bf16.mxu0 0
        %1272 = vmatpush1.bf16.msra.mxu0 %v1226
        %1273 = vmatprep.subr.bf16.mxu0 0
        %1274 = vmatpush1.bf16.msra.mxu0 %v1227
        %1275 = vmatprep.subr.bf16.mxu0 0
        %1276 = vmatpush1.bf16.msra.mxu0 %v1228
        %1277 = vmatprep.mubr.bf16.mxu0 %v1107
        %1278 = vmatmul.mubr.bf16.gmra.mrb[0].mxu0 %v1106
        %v1279 = vpop.f32.mrb[0].mxu0
        %v1280 = vadd.f32 %v1147, %v1279
        %v1281 = vpop.f32.mrb[0].mxu0
        %v1282 = vpop.f32.mrb[0].mxu0
        %v1283 = vadd.f32 %v1147, %v1282
        %v1284 = vpop.f32.mrb[0].mxu0
        %1285 = vmatprep.mubr.bf16.mxu0 %v1109
        %1286 = vmatmul.mubr.bf16.gmra.mrb[0].mxu0 %v1108
        %v1287 = vpop.f32.mrb[0].mxu0
        %v1288 = vadd.f32 %v1147, %v1287
        %v1289 = vpop.f32.mrb[0].mxu0
        %v1290 = vpop.f32.mrb[0].mxu0
        %v1291 = vadd.f32 %v1147, %v1290
        %v1292 = vpop.f32.mrb[0].mxu0
        %1293 = vdwg.mxu0
        %v1294 = vmax.f32 %v1280, 0.0
        %v1295 = vmax.f32 %v1283, 0.0
        %v1296 = vmax.f32 %v1288, 0.0
        %v1297 = vmax.f32 %v1291, 0.0
        %1298 = vst [vmem:[%s314] sm:$0xff] %v1294
        %1299 = vst [vmem:[%s314 + $0x8] sm:$0xff] %v1295
        %1300 = vst [vmem:[%s314 + $0x10] sm:$0xff] %v1296
        %1301 = vst [vmem:[%s314 + $0x18] sm:$0xff] %v1297
        %s1302 = sand.u32 %s183, 1
        %s1303 = scalar_lea.sflag [#allocation4], %s1302
        %s1304 = sand.u32 %s183, 1
        %s1305 = smul.addr %s1304, 32
        %s1306 = scalar_lea.vmem [#allocation7], %s1305
        // Predicated region
        $region57: #{tpu_custom_call.1} parent=47 // pred_check
          %p1307 = pneg %p193
        $region58: #{tpu_custom_call.1} parent=47 // pred_check_branch
          %1309 = sbr.rel (%p1307) target = $region60
        $region59: #{tpu_custom_call.1} parent=47 // pred_region
          %s1310 = smul.u32 4, %s23
          %s1311 = ssub.s32 13, %s1310
          %p1312 = scmp.lt.s32.totalorder %s1311, 4
          %s1313 = scalar_select %p1312, %s1311, 4
          %s1314 = smul.u32 128, %s1313
          %s1316 = ssub.s32 512, %s1314
          %1317 = vsyncadd %s1303, %s1316
          %p1318 = scmp.ne.s32.totalorder 0, %s1314
          %s1319 = smul.addr %s1310, 128
          %s1320 = scalar_lea.hbm %s7, %s1319
          %s1321 = smul.u32 8, %s1313
          %s1322 = sshll.u32 %s1306, 4
          %s1323 = int_to_ptr.vmem [resolvable:$true] %s1322
          %s1324 = sshll.u32 %s1321, 4
          %1328 = dma.vmem_to_hbm [thread:$0]  (%p1318), %s1323, %s1324, %s1320, %s1303, 128, 128, 8
        $region60: #{tpu_custom_call.1} parent=47 // pred_fallthru
          _
      $region48: #{tpu_custom_call.1} parent=5 // pred_fallthru
        _
      %p1329 = scmp.le.s32.totalorder 2, %s18
      // Predicated region
      $region61: #{tpu_custom_call.1} parent=5 // pred_check
        %p1330 = pneg %p1329
      $region62: #{tpu_custom_call.1} parent=5 // pred_check_branch
        %1332 = sbr.rel (%p1330) target = $region64
      $region63: #{tpu_custom_call.1} parent=5 // pred_region
        %s1333 = ssub.s32 %s18, 2
        // Predicated region
        $region65: #{tpu_custom_call.1} parent=63 // pred_check
          %p1334 = pneg %p199
        $region66: #{tpu_custom_call.1} parent=63 // pred_check_branch
          %1336 = sbr.rel (%p1334) target = $region68
        $region67: #{tpu_custom_call.1} parent=63 // pred_region
          %s1337 = sand.u32 %s184, 1
          %s1338 = scalar_lea.sflag [#allocation4], %s1337
          %s1339 = sand.u32 %s184, 1
          %s1340 = smul.addr %s1339, 32
          %s1341 = scalar_lea.vmem [#allocation7], %s1340
          %1342 = dma.done %s1338, 512
        $region68: #{tpu_custom_call.1} parent=63 // pred_fallthru
          _
      $region64: #{tpu_custom_call.1} parent=5 // pred_fallthru
        _
    $region6: #{tpu_custom_call.1} parent=1 // loop_footer
      %s22 = sadd.s32 1, %s18
    $region7: #{tpu_custom_call.1} parent=1 // loop_footer_branch
      %17 = sbr.rel target = $region3
    $region8: #{tpu_custom_call.1} parent=1 // loop_exit
      _
    %1343 = vsyncpa [#allocation3], 1
    %s1344 = scalar_lea.sflag [#allocation3], 1
    %1345 = vsyncpa %s1344, 1
    %1346 = vsyncpa [#allocation6], 1
    %1347 = vsyncpa [#allocation4], 1
    %s1348 = scalar_lea.sflag [#allocation4], 1
    %1349 = vsyncpa %s1348, 1

</llo_original>
